<compile_context>
chip_gen: v7x
topology: tpu7x:2x2x1
jax: 0.10.0
libtpu: 0.0.40
codegen_flags: <defaults>
</compile_context>

<pallas_src>
import functools

import jax
import jax.numpy as jnp
from jax.experimental import pallas as pl
from jax.experimental.pallas import tpu as pltpu

EPS = 1e-5

# pl.Squeezed() drops the size-1 batch dim from the kernel Refs; fall back to
# the legacy `None` spelling on older jax.
_SQUEEZE = pl.Squeezed() if hasattr(pl, "Squeezed") else None


# ----------------------------------------------------------------------------
# Pass 1: per-batch, per-channel mean / rstd  (mean_variance_norm statistics)
# ----------------------------------------------------------------------------
def _stats_kernel(x_ref, mean_ref, rstd_ref, sum_sc, sq_sc, *, n_total):
    ni = pl.program_id(1)

    @pl.when(ni == 0)
    def _init():
        sum_sc[...] = jnp.zeros_like(sum_sc)
        sq_sc[...] = jnp.zeros_like(sq_sc)

    x = x_ref[...].astype(jnp.float32)                       # (C, TN)
    sum_sc[...] += jnp.sum(x, axis=1, keepdims=True)
    sq_sc[...] += jnp.sum(x * x, axis=1, keepdims=True)

    @pl.when(ni == pl.num_programs(1) - 1)
    def _finalize():
        mean = sum_sc[...] * (1.0 / n_total)
        # unbiased (ddof=1) variance, matching torch .var() in calc_mean_std.
        # (n_total == 1 would divide by zero — same behaviour as the reference.)
        var = (sq_sc[...] - n_total * mean * mean) / (n_total - 1.0)
        mean_ref[...] = mean
        rstd_ref[...] = jax.lax.rsqrt(var + EPS)


def _channel_stats(x_flat, tile_n):
    b, c, n = x_flat.shape
    assert n % tile_n == 0
    kernel = functools.partial(_stats_kernel, n_total=float(n))
    return pl.pallas_call(
        kernel,
        out_shape=(jax.ShapeDtypeStruct((b, c, 1), jnp.float32),
                   jax.ShapeDtypeStruct((b, c, 1), jnp.float32)),
        grid=(b, n // tile_n),
        in_specs=[pl.BlockSpec((_SQUEEZE, c, tile_n), lambda bi, ni: (bi, 0, ni))],
        out_specs=(pl.BlockSpec((_SQUEEZE, c, 1), lambda bi, ni: (bi, 0, 0)),
                   pl.BlockSpec((_SQUEEZE, c, 1), lambda bi, ni: (bi, 0, 0))),
        scratch_shapes=[pltpu.VMEM((c, 1), jnp.float32),
                        pltpu.VMEM((c, 1), jnp.float32)],
        compiler_params=pltpu.CompilerParams(
            dimension_semantics=("parallel", "arbitrary")),
    )(x_flat)


# ----------------------------------------------------------------------------
# Pass 2: flash-style tiled style-attention
# ----------------------------------------------------------------------------
def _sanet_attention_kernel(
        cmean_ref, crstd_ref, smean_ref, srstd_ref,       # (C, 1) each
        c_ref, s_ref,                                      # (C, TQ), (C, TK)
        wf_ref, bf_ref, wg_ref, bg_ref,
        wh_ref, bh_ref, wo_ref, bo_ref,                    # (C, C) / (C, 1)
        o_ref,                                             # (C, TQ)
        f_sc, acc_sc, m_sc, l_sc,                          # VMEM scratch
        *, compute_dtype, approx_recip):
    ki = pl.program_id(2)

    @pl.when(ki == 0)
    def _start_query_tile():
        # F = f(mvn(content)) for this query tile: computed once per (b, qi)
        # and cached in VMEM so it is not redone for every kv step.
        c_n = (c_ref[...].astype(jnp.float32) - cmean_ref[...]) * crstd_ref[...]
        f = jnp.dot(wf_ref[...].astype(compute_dtype),
                    c_n.astype(compute_dtype),
                    preferred_element_type=jnp.float32) + bf_ref[...]
        f_sc[...] = f.astype(compute_dtype)
        m_sc[...] = jnp.full_like(m_sc, -jnp.inf)
        l_sc[...] = jnp.zeros_like(l_sc)
        acc_sc[...] = jnp.zeros_like(acc_sc)

    style = s_ref[...].astype(jnp.float32)                               # (C, TK)
    s_n = (style - smean_ref[...]) * srstd_ref[...]
    g = jnp.dot(wg_ref[...].astype(compute_dtype), s_n.astype(compute_dtype),
                preferred_element_type=jnp.float32) + bg_ref[...]        # (C, TK)
    # h-conv bias is deferred to finalize: softmax rows sum to 1, so it adds
    # exactly b_h to the attention output. Saves a (C,TK) broadcast per step.
    h = jnp.dot(wh_ref[...].astype(compute_dtype), style.astype(compute_dtype),
                preferred_element_type=jnp.float32)                      # (C, TK)

    # logits[k, q] = sum_c G[c, k] * F[c, q]; dot_general contracts the
    # channel dim of both operands — no transposed copy is materialized.
    logits = jax.lax.dot_general(
        g.astype(compute_dtype), f_sc[...],
        (((0,), (0,)), ((), ())),
        preferred_element_type=jnp.float32)                              # (TK, TQ)

    # online softmax over the style (kv) axis; state is (1, TQ) per query col,
    # so every rescale broadcasts along sublanes (cheap, no transposes).
    m_prev = m_sc[...]
    m_new = jnp.maximum(m_prev, jnp.max(logits, axis=0, keepdims=True))
    alpha = jnp.exp(m_prev - m_new)                                      # (1, TQ)
    p = jnp.exp(logits - m_new)                                          # (TK, TQ)
    l_sc[...] = alpha * l_sc[...] + jnp.sum(p, axis=0, keepdims=True)
    acc_sc[...] = alpha * acc_sc[...] + jnp.dot(
        h.astype(compute_dtype), p.astype(compute_dtype),
        preferred_element_type=jnp.float32)                              # (C, TQ)
    m_sc[...] = m_new

    @pl.when(ki == pl.num_programs(2) - 1)
    def _finalize_query_tile():
        inv_l = pl.reciprocal(l_sc[...], approx=approx_recip)            # (1, TQ)
        att = acc_sc[...] * inv_l + bh_ref[...]                          # + deferred b_h
        out = jnp.dot(wo_ref[...].astype(compute_dtype),
                      att.astype(compute_dtype),
                      preferred_element_type=jnp.float32)
        out = out + bo_ref[...] + c_ref[...].astype(jnp.float32)         # residual
        o_ref[...] = out.astype(o_ref.dtype)


# ----------------------------------------------------------------------------
# Tiling helpers
# ----------------------------------------------------------------------------
def _default_tile_cap():
    # Re-derive the per-step tile budget from physical VMEM
    # (v5e/v6e: 128 MiB -> 512-wide tiles; v7x: 64 MiB -> 256-wide tiles).
    try:
        vmem = pltpu.get_tpu_info().vmem_capacity_bytes
    except Exception:
        vmem = 64 * 1024 * 1024
    return 512 if vmem >= 96 * 1024 * 1024 else 256


def _pick_tile(n, cap):
    # Largest multiple of 128 that divides n (capped); otherwise the full
    # extent (a full-dim block always satisfies the (8,128) constraint).
    if n % 128 != 0:
        return n
    tile = 128
    while tile * 2 <= cap and n % (tile * 2) == 0:
        tile *= 2
    return tile


# ----------------------------------------------------------------------------
# Forward wrapper
# ----------------------------------------------------------------------------
def sanet_forward(content, style, params, *, tq=None, tk=None,
                  compute_dtype=jnp.bfloat16):
    wf, bf, wg, bg, wh, bh, wo, bo = params
    b, c, h, w = content.shape
    bs, cs, hs, ws = style.shape
    assert bs == b and cs == c
    n_c = h * w
    n_s = hs * ws

    cap = _default_tile_cap()
    if tq is None:
        tq = _pick_tile(n_c, cap)
    if tk is None:
        tk = _pick_tile(n_s, cap)
    assert n_c % tq == 0 and n_s % tk == 0

    cf = content.reshape(b, c, n_c)          # keep HBM dtype (no f32 upcast)
    sf = style.reshape(b, c, n_s)

    # Pass 1: mean / rstd for mean_variance_norm (global spatial reduction).
    c_mean, c_rstd = _channel_stats(cf, tq)
    s_mean, s_rstd = _channel_stats(sf, tk)

    grid = (b, n_c // tq, n_s // tk)

    kernel = functools.partial(
        _sanet_attention_kernel,
        compute_dtype=compute_dtype,
        approx_recip=bool(jnp.dtype(compute_dtype) != jnp.dtype(jnp.float32)),
    )

    stat_spec = pl.BlockSpec((_SQUEEZE, c, 1), lambda b_, qi, ki: (b_, 0, 0))
    c_spec = pl.BlockSpec((_SQUEEZE, c, tq), lambda b_, qi, ki: (b_, 0, qi))
    s_spec = pl.BlockSpec((_SQUEEZE, c, tk), lambda b_, qi, ki: (b_, 0, ki))
    o_spec = pl.BlockSpec((_SQUEEZE, c, tq), lambda b_, qi, ki: (b_, 0, qi))

    def run(weight_mode):
        kwargs = {} if weight_mode is None else {"pipeline_mode": weight_mode}
        w_spec = pl.BlockSpec((c, c), lambda b_, qi, ki: (0, 0), **kwargs)
        bias_spec = pl.BlockSpec((c, 1), lambda b_, qi, ki: (0, 0), **kwargs)
        return pl.pallas_call(
            kernel,
            out_shape=jax.ShapeDtypeStruct((b, c, n_c), content.dtype),
            grid=grid,
            in_specs=[stat_spec, stat_spec, stat_spec, stat_spec,
                      c_spec, s_spec,
                      w_spec, bias_spec,     # f
                      w_spec, bias_spec,     # g
                      w_spec, bias_spec,     # h
                      w_spec, bias_spec],    # out_conv
            out_specs=o_spec,
            scratch_shapes=[
                pltpu.VMEM((c, tq), compute_dtype),   # cached F tile
                pltpu.VMEM((c, tq), jnp.float32),     # online-softmax accumulator
                pltpu.VMEM((1, tq), jnp.float32),     # running max m
                pltpu.VMEM((1, tq), jnp.float32),     # running sum l
            ],
            compiler_params=pltpu.CompilerParams(
                dimension_semantics=("parallel", "parallel", "arbitrary"),
                vmem_limit_bytes=48 * 1024 * 1024),   # fits v7x's 64 MiB VMEM
        )(c_mean, c_rstd, s_mean, s_rstd, cf, sf,
          wf, bf, wg, bg, wh, bh, wo, bo)

    try:
        # Constant-index weights/biases only need one VMEM buffer;
        # double-buffering invariant blocks just burns VMEM (worst on v7x).
        out_flat = run(pl.Buffered(1) if hasattr(pl, "Buffered") else None)
    except Exception:
        out_flat = run(None)   # older jax: fall back to default buffering

    return out_flat.reshape(b, c, h, w)


# ----------------------------------------------------------------------------
# Params + pure-JAX reference (mirrors the PyTorch module)
# ----------------------------------------------------------------------------
def init_params(key, c):
    ks = jax.random.split(key, 8)
    scale = 0.1
    wf = scale * jax.random.normal(ks[0], (c, c), jnp.float32)
    bf = scale * jax.random.normal(ks[1], (c, 1), jnp.float32)
    wg = scale * jax.random.normal(ks[2], (c, c), jnp.float32)
    bg = scale * jax.random.normal(ks[3], (c, 1), jnp.float32)
    wh = scale * jax.random.normal(ks[4], (c, c), jnp.float32)
    bh = scale * jax.random.normal(ks[5], (c, 1), jnp.float32)
    wo = scale * jax.random.normal(ks[6], (c, c), jnp.float32)
    bo = scale * jax.random.normal(ks[7], (c, 1), jnp.float32)
    return (wf, bf, wg, bg, wh, bh, wo, bo)


def sanet_reference(content, style, params):
    wf, bf, wg, bg, wh, bh, wo, bo = params
    b, c, h, w = content.shape
    _, _, hs, ws = style.shape

    def mvn(x):
        bb, cc = x.shape[:2]
        flat = x.reshape(bb, cc, -1)
        mean = flat.mean(axis=2).reshape(bb, cc, 1, 1)
        var = flat.var(axis=2, ddof=1) + EPS
        std = jnp.sqrt(var).reshape(bb, cc, 1, 1)
        return (x - mean) / std

    def conv1x1(x, wt, bi):
        bb, cc, hh, ww = x.shape
        y = jnp.einsum('oc,bcn->bon', wt, x.reshape(bb, cc, hh * ww))
        return (y + bi[None]).reshape(bb, -1, hh, ww)

    F = conv1x1(mvn(content), wf, bf)
    G = conv1x1(mvn(style), wg, bg)
    H = conv1x1(style, wh, bh)
    Fm = F.reshape(b, c, h * w).transpose(0, 2, 1)
    Gm = G.reshape(b, c, hs * ws)
    S = jnp.einsum('bnc,bcm->bnm', Fm, Gm)
    S = jax.nn.softmax(S, axis=-1)
    Hm = H.reshape(b, c, hs * ws)
    O = jnp.einsum('bcm,bnm->bcn', Hm, S).reshape(b, c, h, w)
    O = conv1x1(O, wo, bo)
    return O + content


if __name__ == "__main__":
    key = jax.random.PRNGKey(0)
    k_c, k_s, k_p = jax.random.split(key, 3)

    # Small smoke-test shapes; tq=tk=128 forces multiple query tiles and
    # multiple kv steps so the online-softmax / accumulator path is exercised.
    B, C, H, W = 2, 4, 16, 16        # Nc = 256  -> 2 query tiles
    HS, WS = 16, 24                  # Ns = 384  -> 3 kv tiles
    content = jax.random.normal(k_c, (B, C, H, W), jnp.float32)
    style = jax.random.normal(k_s, (B, C, HS, WS), jnp.float32)
    params = init_params(k_p, C)

    ref = sanet_reference(content, style, params)

    # Exact-parity path: f32 MXU feeds, exact reciprocal.
    out_f32 = sanet_forward(content, style, params, tq=128, tk=128,
                            compute_dtype=jnp.float32)
    out_f32 = jax.block_until_ready(out_f32)
    assert out_f32.shape == ref.shape
    assert jnp.allclose(out_f32, ref, atol=1e-4, rtol=1e-4), (
        float(jnp.max(jnp.abs(out_f32 - ref))))

    # Fast path: bf16 MXU feeds with f32 accumulation, approx reciprocal.
    out_bf16 = sanet_forward(content, style, params, tq=128, tk=128)
    out_bf16 = jax.block_until_ready(out_bf16)
    assert out_bf16.shape == ref.shape
    assert jnp.allclose(out_bf16, ref, atol=3e-2, rtol=3e-2), (
        float(jnp.max(jnp.abs(out_bf16 - ref))))

    print("KERNEL_OK")
</pallas_src>

<mosaic_0001>
module attributes {stable_mosaic.version = 11 : i64} {
  func.func @_stats_kernel(%arg0: i32, %arg1: i32, %arg2: memref<1x4x128xf32, #tpu.memory_space<vmem>>, %arg3: memref<1x4x1xf32, #tpu.memory_space<vmem>>, %arg4: memref<1x4x1xf32, #tpu.memory_space<vmem>>, %arg5: memref<4x1xf32, #tpu.memory_space<vmem>>, %arg6: memref<4x1xf32, #tpu.memory_space<vmem>>) attributes {dimension_semantics = [#tpu.dimension_semantics<parallel>, #tpu.dimension_semantics<arbitrary>], iteration_bounds = array<i64: 2, 2>, scalar_prefetch = 0 : i64, scratch_operands = 2 : i64, tpu.core_type = #tpu.core_type<tc>, window_params = [{transform_indices = @transform_0, window_bounds = array<i64: 1, 4, 128>}, {transform_indices = @transform_1, window_bounds = array<i64: 1, 4, 1>}, {transform_indices = @transform_2, window_bounds = array<i64: 1, 4, 1>}]} {
    %c0_i32 = arith.constant 0 : i32
    %0 = arith.cmpi eq, %arg1, %c0_i32 : i32
    %1 = arith.extui %0 : i1 to i32
    %c0_i32_0 = arith.constant 0 : i32
    %2 = arith.cmpi ne, %1, %c0_i32_0 : i32
    scf.if %2 {
      %cst_13 = arith.constant 0.000000e+00 : f32
      %19 = vector.broadcast %cst_13 : f32 to vector<4x1xf32>
      %c0_14 = arith.constant 0 : index
      %c0_15 = arith.constant 0 : index
      %20 = vector.load %arg5[%c0_14, %c0_15] : memref<4x1xf32, #tpu.memory_space<vmem>>, vector<4x1xf32>
      tpu.vector_store %arg5[%c0_14, %c0_15], %19 {strides = array<i32>} : memref<4x1xf32, #tpu.memory_space<vmem>>, vector<4x1xf32>,
      %cst_16 = arith.constant 0.000000e+00 : f32
      %21 = vector.broadcast %cst_16 : f32 to vector<4x1xf32>
      %c0_17 = arith.constant 0 : index
      %c0_18 = arith.constant 0 : index
      %22 = vector.load %arg6[%c0_17, %c0_18] : memref<4x1xf32, #tpu.memory_space<vmem>>, vector<4x1xf32>
      tpu.vector_store %arg6[%c0_17, %c0_18], %21 {strides = array<i32>} : memref<4x1xf32, #tpu.memory_space<vmem>>, vector<4x1xf32>,
    } else {
    }
    %c0 = arith.constant 0 : index
    %c0_1 = arith.constant 0 : index
    %c0_2 = arith.constant 0 : index
    %3 = vector.load %arg2[%c0, %c0_1, %c0_2] : memref<1x4x128xf32, #tpu.memory_space<vmem>>, vector<1x4x128xf32>
    %4 = vector.shape_cast %3 : vector<1x4x128xf32> to vector<4x128xf32>
    %c0_3 = arith.constant 0 : index
    %c0_4 = arith.constant 0 : index
    %5 = vector.load %arg5[%c0_3, %c0_4] : memref<4x1xf32, #tpu.memory_space<vmem>>, vector<4x1xf32>
    %cst = arith.constant dense<0.000000e+00> : vector<4xf32>
    %6 = vector.multi_reduction <add>, %4, %cst [1] : vector<4x128xf32> to vector<4xf32>
    %7 = vector.shape_cast %6 : vector<4xf32> to vector<4x1xf32>
    %8 = arith.addf %5, %7 : vector<4x1xf32>
    %c0_5 = arith.constant 0 : index
    %c0_6 = arith.constant 0 : index
    %9 = vector.load %arg5[%c0_5, %c0_6] : memref<4x1xf32, #tpu.memory_space<vmem>>, vector<4x1xf32>
    tpu.vector_store %arg5[%c0_5, %c0_6], %8 {strides = array<i32>} : memref<4x1xf32, #tpu.memory_space<vmem>>, vector<4x1xf32>,
    %c0_7 = arith.constant 0 : index
    %c0_8 = arith.constant 0 : index
    %10 = vector.load %arg6[%c0_7, %c0_8] : memref<4x1xf32, #tpu.memory_space<vmem>>, vector<4x1xf32>
    %11 = arith.mulf %4, %4 : vector<4x128xf32>
    %cst_9 = arith.constant dense<0.000000e+00> : vector<4xf32>
    %12 = vector.multi_reduction <add>, %11, %cst_9 [1] : vector<4x128xf32> to vector<4xf32>
    %13 = vector.shape_cast %12 : vector<4xf32> to vector<4x1xf32>
    %14 = arith.addf %10, %13 : vector<4x1xf32>
    %c0_10 = arith.constant 0 : index
    %c0_11 = arith.constant 0 : index
    %15 = vector.load %arg6[%c0_10, %c0_11] : memref<4x1xf32, #tpu.memory_space<vmem>>, vector<4x1xf32>
    tpu.vector_store %arg6[%c0_10, %c0_11], %14 {strides = array<i32>} : memref<4x1xf32, #tpu.memory_space<vmem>>, vector<4x1xf32>,
    %c1_i32 = arith.constant 1 : i32
    %16 = arith.cmpi eq, %arg1, %c1_i32 : i32
    %17 = arith.extui %16 : i1 to i32
    %c0_i32_12 = arith.constant 0 : i32
    %18 = arith.cmpi ne, %17, %c0_i32_12 : i32
    scf.if %18 {
      %c0_13 = arith.constant 0 : index
      %c0_14 = arith.constant 0 : index
      %19 = vector.load %arg5[%c0_13, %c0_14] : memref<4x1xf32, #tpu.memory_space<vmem>>, vector<4x1xf32>
      %cst_15 = arith.constant 3.906250e-03 : f32
      %20 = vector.broadcast %cst_15 : f32 to vector<4x1xf32>
      %21 = arith.mulf %19, %20 : vector<4x1xf32>
      %c0_16 = arith.constant 0 : index
      %c0_17 = arith.constant 0 : index
      %22 = vector.load %arg6[%c0_16, %c0_17] : memref<4x1xf32, #tpu.memory_space<vmem>>, vector<4x1xf32>
      %cst_18 = arith.constant 2.560000e+02 : f32
      %23 = vector.broadcast %cst_18 : f32 to vector<4x1xf32>
      %24 = arith.mulf %23, %21 : vector<4x1xf32>
      %25 = arith.mulf %24, %21 : vector<4x1xf32>
      %26 = arith.subf %22, %25 : vector<4x1xf32>
      %cst_19 = arith.constant 2.550000e+02 : f32
      %27 = vector.broadcast %cst_19 : f32 to vector<4x1xf32>
      %28 = arith.divf %26, %27 : vector<4x1xf32>
      %c0_20 = arith.constant 0 : index
      %c0_21 = arith.constant 0 : index
      %c0_22 = arith.constant 0 : index
      %29 = vector.load %arg3[%c0_20, %c0_21, %c0_22] : memref<1x4x1xf32, #tpu.memory_space<vmem>>, vector<1x4x1xf32>
      %30 = vector.shape_cast %29 : vector<1x4x1xf32> to vector<4x1xf32>
      %31 = vector.shape_cast %21 : vector<4x1xf32> to vector<1x4x1xf32>
      tpu.vector_store %arg3[%c0_20, %c0_21, %c0_22], %31 {strides = array<i32>} : memref<1x4x1xf32, #tpu.memory_space<vmem>>, vector<1x4x1xf32>,
      %cst_23 = arith.constant 9.99999974E-6 : f32
      %32 = vector.broadcast %cst_23 : f32 to vector<4x1xf32>
      %33 = arith.addf %28, %32 : vector<4x1xf32>
      %34 = math.rsqrt %33 : vector<4x1xf32>
      %c0_24 = arith.constant 0 : index
      %c0_25 = arith.constant 0 : index
      %c0_26 = arith.constant 0 : index
      %35 = vector.load %arg4[%c0_24, %c0_25, %c0_26] : memref<1x4x1xf32, #tpu.memory_space<vmem>>, vector<1x4x1xf32>
      %36 = vector.shape_cast %35 : vector<1x4x1xf32> to vector<4x1xf32>
      %37 = vector.shape_cast %34 : vector<4x1xf32> to vector<1x4x1xf32>
      tpu.vector_store %arg4[%c0_24, %c0_25, %c0_26], %37 {strides = array<i32>} : memref<1x4x1xf32, #tpu.memory_space<vmem>>, vector<1x4x1xf32>,
    } else {
    }
    return
  }
  func.func @transform_0(%arg0: i32, %arg1: i32) -> (i32, i32, i32) {
    %c0_i32 = arith.constant 0 : i32
    %c0_i32_0 = arith.constant 0 : i32
    return %arg0, %c0_i32, %arg1 : i32, i32, i32
  }
  func.func @transform_1(%arg0: i32, %arg1: i32) -> (i32, i32, i32) {
    %c0_i32 = arith.constant 0 : i32
    %c0_i32_0 = arith.constant 0 : i32
    %c0_i32_1 = arith.constant 0 : i32
    return %arg0, %c0_i32, %c0_i32_0 : i32, i32, i32
  }
  func.func @transform_2(%arg0: i32, %arg1: i32) -> (i32, i32, i32) {
    %c0_i32 = arith.constant 0 : i32
    %c0_i32_0 = arith.constant 0 : i32
    %c0_i32_1 = arith.constant 0 : i32
    return %arg0, %c0_i32, %c0_i32_0 : i32, i32, i32
  }
}

</mosaic_0001>

<llo_original>
// kernel: tpu_custom_call.1
$region0: #{tpu_custom_call.1}
  #allocation0 [shape = 'u32[]', space=smem, size = 0x4, offset = 0x4, fixed_abs, tag = 'smem constant byte address 0x4 - core index']
  #allocation1 [shape = 'u32[144,128]{1,0:T(1,128)}', space=vmem, size = 0x12000, scoped, tag = 'internal scratch']
  #allocation2 [shape = 'f32[4,1]{1,0:T(4,128)}', space=vmem, size = 0x800, scoped, tag = 'scratch operand']
  #allocation3 [shape = 'f32[4,1]{1,0:T(4,128)}', space=vmem, size = 0x800, scoped, tag = 'scratch operand']
  %s0 = inlined_call_operand.hbm [shape: f32[2,4,256], index: 0, kind: input, shape index: {}]
  %s1 = inlined_call_operand.vmem [shape: f32[2,4,1], index: 1, kind: output, shape index: {0}]
  %s2 = inlined_call_operand.vmem [shape: f32[2,4,1], index: 2, kind: output, shape index: {1}]
  %3 = xla_tuple %s1, %s2
  %s4 = sld [smem:[#allocation0]]
  $region57: #{tpu_custom_call.1} parent=0
    _
  %s6 = ssub.s32 1, %s4
  %s7 = scalar_select 0, %s6, %s4
  $region1: #{tpu_custom_call.1} parent=0
    #allocation4 [shape = 'u8[4096]{0}', space=vmem, size = 0x1000, scoped, tag = 'input window, operand 0']
    #allocation5 [shape = 's32[2]{0}', space=sflag, size = 0x8, scoped, tag = 'scoped memory for tpu_custom_call.1']
    %8 = vsyncpa [#allocation5], 0
    %s9 = scalar_lea.sflag [#allocation5], 1
    %10 = vsyncpa %s9, 0
    loop: start=0, step=1, limit=6
    $region2: #{tpu_custom_call.1} parent=1 // loop_pre_header
      _
    $region3: #{tpu_custom_call.1} parent=1 // loop_header
      %s12 = sphi 0, %s16
      %p13 = scmp.ge.s32.totalorder %s12, 6
      %s19 = sphi 0, %s31
      %s20 = sphi 0, %s27
      %s21 = sphi 0, %s19
      %s22 = sphi 0, %s20
      %s23 = sphi 0, %s21
      %s24 = sphi 0, %s22
      %s36 = sphi 0, %s38
      %s39 = sphi 0, %s36
      %s40 = sphi 0, %s39
      %s56 = sphi 0, %s40
      %s62 = sphi 0, %s64
      %s65 = sphi 0, %s62
      %s66 = sphi 0, %s65
      %s82 = sphi 0, %s66
      %s88 = sphi 0, %s90
      %s91 = sphi 0, %s88
      %s92 = sphi 0, %s91
      %s108 = sphi 0, %s92
    $region4: #{tpu_custom_call.1} parent=1 // loop_header_branch
      %15 = sbr.rel (%p13) target = $region8
    $region5: #{tpu_custom_call.1} parent=1 // loop_body
      %s17 = ssub.s32 %s12, 1
      %s18 = ssub.s32 %s12, 2
      %s25 = sadd.s32 1, %s20
      %p26 = scmp.ge.s32.totalorder %s25, 2
      %s27 = scalar_select %p26, 0, %s25
      %s28 = sadd.s32 1, %s19
      %s29 = scalar_select %p26, %s28, %s19
      %p30 = scmp.ge.s32.totalorder %s29, 2
      %s31 = scalar_select %p30, 0, %s29
      %s32 = ssub.s32 %s19, %s31
      %s33 = ssub.s32 %s20, %s27
      %s34 = sor.u32 %s32, %s33
      %p35 = scmp.eq.s32.totalorder %s34, 0
      %s37 = sadd.s32 %s36, 1
      %s38 = scalar_select %p35, %s36, %s37
      %p41 = pneg %p35
      %p42 = scmp.eq.s32.totalorder %s12, 3
      %p43 = por %p41, %p42
      %p44 = scmp.ne.s32.totalorder %s36, %s39
      %p45 = scmp.eq.s32.totalorder %s12, 0
      %p46 = por %p44, %p45
      %p47 = scmp.ne.s32.totalorder %s36, %s39
      %p48 = scmp.eq.s32.totalorder %s17, 3
      %p49 = por %p47, %p48
      %p50 = scmp.ne.s32.totalorder %s39, %s40
      %p51 = scmp.eq.s32.totalorder %s17, 0
      %p52 = por %p50, %p51
      %p53 = scmp.ne.s32.totalorder %s39, %s40
      %p54 = scmp.eq.s32.totalorder %s18, 3
      %p55 = por %p53, %p54
      %p57 = scmp.ne.s32.totalorder %s40, %s56
      %p58 = scmp.eq.s32.totalorder %s18, 0
      %p59 = por %p57, %p58
      %s60 = ssub.s32 %s19, %s31
      %p61 = scmp.eq.s32.totalorder %s60, 0
      %s63 = sadd.s32 %s62, 1
      %s64 = scalar_select %p61, %s62, %s63
      %p67 = pneg %p61
      %p68 = scmp.eq.s32.totalorder %s12, 3
      %p69 = por %p67, %p68
      %p70 = scmp.ne.s32.totalorder %s62, %s65
      %p71 = scmp.eq.s32.totalorder %s12, 0
      %p72 = por %p70, %p71
      %p73 = scmp.ne.s32.totalorder %s62, %s65
      %p74 = scmp.eq.s32.totalorder %s17, 3
      %p75 = por %p73, %p74
      %p76 = scmp.ne.s32.totalorder %s65, %s66
      %p77 = scmp.eq.s32.totalorder %s17, 0
      %p78 = por %p76, %p77
      %p79 = scmp.ne.s32.totalorder %s65, %s66
      %p80 = scmp.eq.s32.totalorder %s18, 3
      %p81 = por %p79, %p80
      %p83 = scmp.ne.s32.totalorder %s66, %s82
      %p84 = scmp.eq.s32.totalorder %s18, 0
      %p85 = por %p83, %p84
      %s86 = ssub.s32 %s19, %s31
      %p87 = scmp.eq.s32.totalorder %s86, 0
      %s89 = sadd.s32 %s88, 1
      %s90 = scalar_select %p87, %s88, %s89
      %p93 = pneg %p87
      %p94 = scmp.eq.s32.totalorder %s12, 3
      %p95 = por %p93, %p94
      %p96 = scmp.ne.s32.totalorder %s88, %s91
      %p97 = scmp.eq.s32.totalorder %s12, 0
      %p98 = por %p96, %p97
      %p99 = scmp.ne.s32.totalorder %s88, %s91
      %p100 = scmp.eq.s32.totalorder %s17, 3
      %p101 = por %p99, %p100
      %p102 = scmp.ne.s32.totalorder %s91, %s92
      %p103 = scmp.eq.s32.totalorder %s17, 0
      %p104 = por %p102, %p103
      %p105 = scmp.ne.s32.totalorder %s91, %s92
      %p106 = scmp.eq.s32.totalorder %s18, 3
      %p107 = por %p105, %p106
      %p109 = scmp.ne.s32.totalorder %s92, %s108
      %p110 = scmp.eq.s32.totalorder %s18, 0
      %p111 = por %p109, %p110
      %p112 = scmp.le.s32.totalorder 1, %s12
      %p113 = scmp.lt.s32.totalorder %s12, 5
      %p114 = pnand %p112, %p113
      %p115 = pneg %p114
      // Predicated region
      $region9: #{tpu_custom_call.1} parent=5 // pred_check
        _
      $region10: #{tpu_custom_call.1} parent=5 // pred_check_branch
        %117 = sbr.rel (%p114) target = $region12
      $region11: #{tpu_custom_call.1} parent=5 // pred_region
        %s118 = ssub.s32 %s12, 1
      $region12: #{tpu_custom_call.1} parent=5 // pred_fallthru
        _
      %p119 = scmp.lt.s32.totalorder %s12, 4
      // Predicated region
      $region13: #{tpu_custom_call.1} parent=5 // pred_check
        %p120 = pneg %p119
      $region14: #{tpu_custom_call.1} parent=5 // pred_check_branch
        %122 = sbr.rel (%p120) target = $region16
      $region15: #{tpu_custom_call.1} parent=5 // pred_region
        // Predicated region
        $region17: #{tpu_custom_call.1} parent=15 // pred_check
          %p123 = pneg %p46
        $region18: #{tpu_custom_call.1} parent=15 // pred_check_branch
          %125 = sbr.rel (%p123) target = $region20
        $region19: #{tpu_custom_call.1} parent=15 // pred_region
          %s126 = sand.u32 %s36, 1
          %s127 = scalar_lea.sflag [#allocation5], %s126
          %s128 = sand.u32 %s36, 1
          %s129 = smul.addr %s128, 4
          %s130 = scalar_lea.vmem [#allocation4], %s129
          %s132 = ssub.s32 64, 64
          %133 = vsyncadd %s127, %s132
          %s134 = smul.addr %s19, 2
          %s135 = sadd.s32 %s20, %s134
          %s136 = smul.addr %s135, 64
          %s137 = scalar_lea.hbm %s0, %s136
          %s139 = sshll.u32 %s130, 4
          %s140 = int_to_ptr.vmem [resolvable:$true] %s139
          %142 = dma.hbm_to_vmem [thread:$0]  %s137, 64, %s140, %s127
        $region20: #{tpu_custom_call.1} parent=15 // pred_fallthru
          _
      $region16: #{tpu_custom_call.1} parent=5 // pred_fallthru
        _
      %p143 = scmp.le.s32.totalorder 1, %s12
      %p144 = scmp.lt.s32.totalorder %s12, 5
      %p145 = pnand %p143, %p144
      %p146 = pneg %p145
      // Predicated region
      $region21: #{tpu_custom_call.1} parent=5 // pred_check
        _
      $region22: #{tpu_custom_call.1} parent=5 // pred_check_branch
        %148 = sbr.rel (%p145) target = $region24
      $region23: #{tpu_custom_call.1} parent=5 // pred_region
        %s149 = ssub.s32 %s12, 1
        %s150 = sand.u32 %s39, 1
        %s151 = scalar_lea.sflag [#allocation5], %s150
        %s152 = sand.u32 %s39, 1
        %s153 = smul.addr %s152, 4
        %s154 = scalar_lea.vmem [#allocation4], %s153
        // Predicated region
        $region25: #{tpu_custom_call.1} parent=23 // pred_check
          %p155 = pneg %p52
        $region26: #{tpu_custom_call.1} parent=23 // pred_check_branch
          %157 = sbr.rel (%p155) target = $region28
        $region27: #{tpu_custom_call.1} parent=23 // pred_region
          %158 = dma.done %s151, 64
        $region28: #{tpu_custom_call.1} parent=23 // pred_fallthru
          _
        %s159 = sand.u32 %s39, 1
        %s160 = scalar_lea.sflag [#allocation5], %s159
        %s161 = sand.u32 %s39, 1
        %s162 = smul.addr %s161, 4
        %s163 = scalar_lea.vmem [#allocation4], %s162
        %p164 = pneg %p52
        %p165 = pneg %p49
        %p166 = pneg %p78
        %p167 = pneg %p75
        %p168 = scmp.lt.s32.totalorder %s21, 1
        %s169 = scalar_select %p168, %s21, 1
        %s170 = smul.addr %s169, 4
        %s171 = scalar_lea.vmem %s1, %s170
        %p172 = pneg %p104
        %p173 = pneg %p101
        %p174 = scmp.lt.s32.totalorder %s21, 1
        %s175 = scalar_select %p174, %s21, 1
        %s176 = smul.addr %s175, 4
        %s177 = scalar_lea.vmem %s2, %s176
        %p178 = scmp.lt.s32.totalorder %s21, 1
        %s179 = scalar_select %p178, %s21, 1
        %s180 = smul.addr %s179, 4
        %s181 = scalar_lea.vmem %s1, %s180
        %p182 = scmp.lt.s32.totalorder %s21, 1
        %s183 = scalar_select %p182, %s21, 1
        %s184 = smul.addr %s183, 4
        %s185 = scalar_lea.vmem %s2, %s184
        %p186 = scmp.eq.s32.totalorder %s22, 0
        // Predicated region
        $region29: #{tpu_custom_call.1} parent=23 // pred_check
          %p187 = pneg %p186
        $region30: #{tpu_custom_call.1} parent=23 // pred_check_branch
          %189 = sbr.rel (%p187) target = $region32
        $region31: #{tpu_custom_call.1} parent=23 // pred_region
          %vm190 = vcmask 3072
          %191 = vst.msk [vmem:[#allocation2] sm:$0xf] %vm190, 0.0
          %192 = vst.msk [vmem:[#allocation3] sm:$0xf] %vm190, 0.0
        $region32: #{tpu_custom_call.1} parent=23 // pred_fallthru
          _
        %v193 = vld [vmem:[%s154] sm:$0xf]
        %v194 = vld [vmem:[#allocation2] sm:$0xf]
        %vm195 = vcmask 1043456
        %v196 = vsel %vm195, %v193, 0.0
        %197 = vadd.xlane.f32.xlu0 %v196
        %v198 = vpop.xlane.xlu0 %197
        %v199 = vadd.f32 %v194, %v198
        %vm200 = vcmask 3072
        %201 = vst.msk [vmem:[#allocation2] sm:$0xf] %vm200, %v199
        %v202 = vld [vmem:[#allocation3] sm:$0xf]
        %v203 = vmul.f32 %v193, %v193
        %v204 = vsel %vm195, %v203, 0.0
        %205 = vadd.xlane.f32.xlu0 %v204
        %v206 = vpop.xlane.xlu0 %205
        %v207 = vadd.f32 %v202, %v206
        %208 = vst.msk [vmem:[#allocation3] sm:$0xf] %vm200, %v207
        %p209 = scmp.eq.s32.totalorder %s22, 1
        // Predicated region
        $region33: #{tpu_custom_call.1} parent=23 // pred_check
          %p210 = pneg %p209
        $region34: #{tpu_custom_call.1} parent=23 // pred_check_branch
          %212 = sbr.rel (%p210) target = $region36
        $region35: #{tpu_custom_call.1} parent=23 // pred_region
          %v213 = vld [vmem:[#allocation2] sm:$0xf]
          %v214 = vmul.f32 %v213, 0.00390625
          %v215 = vld [vmem:[#allocation3] sm:$0xf]
          %v216 = vmul.f32 %v214, 256.0
          %v217 = vmul.f32 %v216, %v214
          %v218 = vsub.f32 %v215, %v217
          %v219 = vrcp.pop 255.0
          %v220 = vmul.f32 %v218, %v219
          %221 = vst.msk [vmem:[%s181] sm:$0xf] %vm200, %v214
          %v222 = vadd.f32 %v220, 1e-05
          %v223 = vrsqrt.pop %v222
          %224 = vst.msk [vmem:[%s185] sm:$0xf] %vm200, %v223
        $region36: #{tpu_custom_call.1} parent=23 // pred_fallthru
          _
        %p225 = scmp.lt.s32.totalorder %s21, 1
        %s226 = scalar_select %p225, %s21, 1
        %s227 = smul.addr %s226, 4
        %s228 = scalar_lea.vmem %s1, %s227
        %p229 = scmp.lt.s32.totalorder %s21, 1
        %s230 = scalar_select %p229, %s21, 1
        %s231 = smul.addr %s230, 4
        %s232 = scalar_lea.vmem %s2, %s231
        // Predicated region
        $region37: #{tpu_custom_call.1} parent=23 // pred_check
          %p233 = pneg %p75
        $region38: #{tpu_custom_call.1} parent=23 // pred_check_branch
          %235 = sbr.rel (%p233) target = $region40
        $region39: #{tpu_custom_call.1} parent=23 // pred_region
          _
        $region40: #{tpu_custom_call.1} parent=23 // pred_fallthru
          _
        // Predicated region
        $region41: #{tpu_custom_call.1} parent=23 // pred_check
          %p236 = pneg %p101
        $region42: #{tpu_custom_call.1} parent=23 // pred_check_branch
          %238 = sbr.rel (%p236) target = $region44
        $region43: #{tpu_custom_call.1} parent=23 // pred_region
          _
        $region44: #{tpu_custom_call.1} parent=23 // pred_fallthru
          _
      $region24: #{tpu_custom_call.1} parent=5 // pred_fallthru
        _
      %p239 = scmp.le.s32.totalorder 2, %s12
      // Predicated region
      $region45: #{tpu_custom_call.1} parent=5 // pred_check
        %p240 = pneg %p239
      $region46: #{tpu_custom_call.1} parent=5 // pred_check_branch
        %242 = sbr.rel (%p240) target = $region48
      $region47: #{tpu_custom_call.1} parent=5 // pred_region
        %s243 = ssub.s32 %s12, 2
        // Predicated region
        $region49: #{tpu_custom_call.1} parent=47 // pred_check
          %p244 = pneg %p81
        $region50: #{tpu_custom_call.1} parent=47 // pred_check_branch
          %246 = sbr.rel (%p244) target = $region52
        $region51: #{tpu_custom_call.1} parent=47 // pred_region
          %p247 = scmp.lt.s32.totalorder %s23, 1
          %s248 = scalar_select %p247, %s23, 1
          %s249 = smul.addr %s248, 4
          %s250 = scalar_lea.vmem %s1, %s249
        $region52: #{tpu_custom_call.1} parent=47 // pred_fallthru
          _
        // Predicated region
        $region53: #{tpu_custom_call.1} parent=47 // pred_check
          %p251 = pneg %p107
        $region54: #{tpu_custom_call.1} parent=47 // pred_check_branch
          %253 = sbr.rel (%p251) target = $region56
        $region55: #{tpu_custom_call.1} parent=47 // pred_region
          %p254 = scmp.lt.s32.totalorder %s23, 1
          %s255 = scalar_select %p254, %s23, 1
          %s256 = smul.addr %s255, 4
          %s257 = scalar_lea.vmem %s2, %s256
        $region56: #{tpu_custom_call.1} parent=47 // pred_fallthru
          _
      $region48: #{tpu_custom_call.1} parent=5 // pred_fallthru
        _
    $region6: #{tpu_custom_call.1} parent=1 // loop_footer
      %s16 = sadd.s32 1, %s12
    $region7: #{tpu_custom_call.1} parent=1 // loop_footer_branch
      %11 = sbr.rel target = $region3
    $region8: #{tpu_custom_call.1} parent=1 // loop_exit
      _
    %258 = vsyncpa [#allocation5], 1
    %s259 = scalar_lea.sflag [#allocation5], 1
    %260 = vsyncpa %s259, 1

</llo_original>
